<compile_context>
chip_gen: v7x
topology: tpu7x:2x2x1
jax: 0.10.0
libtpu: 0.0.40
codegen_flags: <defaults>
</compile_context>

<pallas_src>
import functools
import math

import numpy as np
import jax
import jax.numpy as jnp
from jax.experimental import pallas as pl
from jax.experimental.pallas import tpu as pltpu


def _make_gaussian_filter(k_size=5, sigma=1.0):
    # Matches init_gaussian_filter in the PyTorch module (unused in forward,
    # built only for parity of parameter initialization).
    center = k_size // 2
    x, y = np.mgrid[0 - center:k_size - center, 0 - center:k_size - center]
    gk = 1.0 / (2.0 * np.pi * sigma) * np.exp(-(np.square(x) + np.square(y)) / (2.0 * np.square(sigma)))
    weight = jnp.asarray(gk, dtype=jnp.float32)[None, None, :, :]   # (1,1,k,k)
    bias = jnp.zeros((1,), dtype=jnp.float32)
    return weight, bias


def _round_up(x, m):
    return ((x + m - 1) // m) * m


def _fea_select_kernel(x_ref, key_ref, vol_ref, *, thr_logit, inv_c):
    # x_ref:   (1, tile_rows, C) VMEM, native dtype
    # key_ref: (1, tile_rows, C) VMEM, native dtype
    # vol_ref: (1, 1, 1)         VMEM f32, resident across the row-tile axis
    t = pl.program_id(1)

    @pl.when(t == 0)
    def _init():
        vol_ref[...] = jnp.zeros_like(vol_ref)

    x = x_ref[...]                                                    # (1, R, C)

    # Row-wise reductions over the channel (lane) axis; accumulate in f32 but
    # keep the C-wide data in its native dtype.
    max_map = jnp.max(x, axis=-1, keepdims=True).astype(jnp.float32)  # (1, R, 1)
    sum_map = jnp.sum(x, axis=-1, keepdims=True, dtype=jnp.float32)   # (1, R, 1)
    gate_logit = max_map + sum_map * inv_c                            # (1, R, 1)

    # sigmoid(z) > thr  <=>  z > logit(thr)   (thr_logit baked at trace time).
    cond = gate_logit > thr_logit                                     # (1, R, 1) bool

    key_ref[...] = jnp.where(cond, x, 0).astype(key_ref.dtype)        # broadcast over C
    vol_ref[...] += jnp.sum(cond.astype(jnp.float32), axis=(1, 2), keepdims=True)


def most_informative_fea_selection(flatten_features, threshold=0.5,
                                   target_tile_bytes=2 * 1024 * 1024):
    """Eval-mode forward. flatten_features: (B, S, C) float32/bf16."""
    B, S, C = flatten_features.shape
    dtype = flatten_features.dtype
    itemsize = jnp.dtype(dtype).itemsize

    # Trace-time logit of the threshold (sigmoid is strictly increasing).
    if 0.0 < threshold < 1.0:
        thr_logit = float(math.log(threshold / (1.0 - threshold)))
    elif threshold >= 1.0:
        thr_logit = float("inf")      # sigmoid(z) > thr is never true
    else:
        thr_logit = float("-inf")     # sigmoid(z) > thr is always true

    # Row tiling: C stays whole inside one block (reductions are over C);
    # tile the spatial axis in multiples of 8 rows, ~target_tile_bytes per tile
    # (double-buffered in + out stays well under v5e's 16 MiB scoped VMEM and
    # v7x's 64 MiB physical VMEM).
    row_bytes = max(1, C * itemsize)
    tile_rows = max(8, min(_round_up(S, 8),
                           (target_tile_bytes // row_bytes) // 8 * 8))
    S_pad = _round_up(S, tile_rows)
    T = S_pad // tile_rows

    x = flatten_features
    if S_pad != S:
        # -inf rows => max+avg = -inf => mask 0 (never counted), key rows = 0
        # and sliced off below.
        pad = jnp.full((B, S_pad - S, C), -jnp.inf, dtype=dtype)
        x = jnp.concatenate([x, pad], axis=1)

    kernel = functools.partial(_fea_select_kernel,
                               thr_logit=thr_logit, inv_c=1.0 / C)

    key_padded, vol = pl.pallas_call(
        kernel,
        out_shape=(
            jax.ShapeDtypeStruct((B, S_pad, C), dtype),
            jax.ShapeDtypeStruct((B, 1, 1), jnp.float32),
        ),
        grid_spec=pltpu.PrefetchScalarGridSpec(
            num_scalar_prefetch=0,
            grid=(B, T),
            in_specs=[pl.BlockSpec((1, tile_rows, C), lambda b, t: (b, t, 0))],
            out_specs=[
                pl.BlockSpec((1, tile_rows, C), lambda b, t: (b, t, 0)),
                # same block across t => resident accumulator, one HBM
                # writeback per batch.
                pl.BlockSpec((1, 1, 1), lambda b, t: (b, 0, 0)),
            ],
        ),
        compiler_params=pltpu.CompilerParams(
            # Batch axis shards across v7x's two TensorCores; the row-tile
            # axis is a reduction (volume accumulator) -> arbitrary.
            dimension_semantics=("parallel", "arbitrary"),
            vmem_limit_bytes=32 * 1024 * 1024,
        ),
    )(x)

    key_spatial = key_padded[:, :S, :] if S_pad != S else key_padded
    agent_comm_volume = vol.reshape(B)
    return key_spatial, agent_comm_volume


def _reference(flatten_features, threshold=0.5):
    x = flatten_features
    max_map = jnp.max(x, axis=2, keepdims=True)
    avg_map = jnp.mean(x, axis=2, keepdims=True)
    gate = jax.nn.sigmoid(max_map + avg_map)
    mask = (gate > threshold).astype(x.dtype)
    key = mask * x
    vol = jnp.sum(mask, axis=(1, 2))
    return key, vol


def _check(B, S, C, threshold, seed, **kwargs):
    key = jax.random.PRNGKey(seed)
    flat = jax.random.normal(key, (B, S, C), dtype=jnp.float32)
    out_key, out_vol = most_informative_fea_selection(flat, threshold, **kwargs)
    out_key = jax.block_until_ready(out_key)
    out_vol = jax.block_until_ready(out_vol)
    ref_key, ref_vol = _reference(flat, threshold)
    assert out_key.shape == (B, S, C)
    assert out_vol.shape == (B,)
    np.testing.assert_allclose(np.asarray(out_key), np.asarray(ref_key),
                               rtol=1e-5, atol=1e-5)
    np.testing.assert_allclose(np.asarray(out_vol), np.asarray(ref_vol),
                               rtol=1e-5, atol=1e-5)


if __name__ == "__main__":
    # Deterministic "parameters" (gaussian filter is built in __init__ but not
    # used in forward; constructed here only for initialization parity).
    _gw, _gb = _make_gaussian_filter(k_size=5, sigma=1.0)

    # Main small-shape check: B=2, spatial_lens=16*16=256, channels=128.
    _check(B=2, S=256, C=128, threshold=0.5, seed=0)

    # Exercise the multi-tile + padded-S path (T > 1, S not a tile multiple).
    _check(B=2, S=1000, C=128, threshold=0.5, seed=0,
           target_tile_bytes=64 * 1024)

    print("KERNEL_OK")
</pallas_src>

<mosaic_0001>
module attributes {stable_mosaic.version = 11 : i64} {
  func.func @_fea_select_kernel(%arg0: i32, %arg1: i32, %arg2: memref<1x256x128xf32, #tpu.memory_space<vmem>>, %arg3: memref<1x256x128xf32, #tpu.memory_space<vmem>>, %arg4: memref<1x1x1xf32, #tpu.memory_space<vmem>>) attributes {dimension_semantics = [#tpu.dimension_semantics<parallel>, #tpu.dimension_semantics<arbitrary>], iteration_bounds = array<i64: 2, 1>, scalar_prefetch = 0 : i64, scratch_operands = 0 : i64, tpu.core_type = #tpu.core_type<tc>, window_params = [{transform_indices = @transform_0, window_bounds = array<i64: 1, 256, 128>}, {transform_indices = @transform_1, window_bounds = array<i64: 1, 256, 128>}, {transform_indices = @transform_2, window_bounds = array<i64: 1, 1, 1>}]} {
    %c0_i32 = arith.constant 0 : i32
    %0 = arith.cmpi eq, %arg1, %c0_i32 : i32
    %1 = arith.extui %0 : i1 to i32
    %c0_i32_0 = arith.constant 0 : i32
    %2 = arith.cmpi ne, %1, %c0_i32_0 : i32
    scf.if %2 {
      %cst_17 = arith.constant 0.000000e+00 : f32
      %26 = vector.broadcast %cst_17 : f32 to vector<1x1x1xf32>
      %c0_18 = arith.constant 0 : index
      %c0_19 = arith.constant 0 : index
      %c0_20 = arith.constant 0 : index
      %27 = vector.load %arg4[%c0_18, %c0_19, %c0_20] : memref<1x1x1xf32, #tpu.memory_space<vmem>>, vector<1x1x1xf32>
      tpu.vector_store %arg4[%c0_18, %c0_19, %c0_20], %26 {strides = array<i32>} : memref<1x1x1xf32, #tpu.memory_space<vmem>>, vector<1x1x1xf32>,
    } else {
    }
    %c0 = arith.constant 0 : index
    %c0_1 = arith.constant 0 : index
    %c0_2 = arith.constant 0 : index
    %3 = vector.load %arg2[%c0, %c0_1, %c0_2] : memref<1x256x128xf32, #tpu.memory_space<vmem>>, vector<1x256x128xf32>
    %cst = arith.constant dense<0xFF800000> : vector<1x256xf32>
    %4 = vector.multi_reduction <maximumf>, %3, %cst [2] : vector<1x256x128xf32> to vector<1x256xf32>
    %5 = vector.shape_cast %4 : vector<1x256xf32> to vector<1x256x1xf32>
    %cst_3 = arith.constant dense<0.000000e+00> : vector<1x256xf32>
    %6 = vector.multi_reduction <add>, %3, %cst_3 [2] : vector<1x256x128xf32> to vector<1x256xf32>
    %7 = vector.shape_cast %6 : vector<1x256xf32> to vector<1x256x1xf32>
    %cst_4 = arith.constant 7.812500e-03 : f32
    %8 = vector.broadcast %cst_4 : f32 to vector<1x256x1xf32>
    %9 = arith.mulf %7, %8 : vector<1x256x1xf32>
    %10 = arith.addf %5, %9 : vector<1x256x1xf32>
    %cst_5 = arith.constant 0.000000e+00 : f32
    %11 = vector.broadcast %cst_5 : f32 to vector<1x256x1xf32>
    %12 = arith.cmpf ogt, %10, %11 : vector<1x256x1xf32>
    %c0_i32_6 = arith.constant 0 : i32
    %13 = arith.sitofp %c0_i32_6 : i32 to f32
    %14 = vector.shape_cast %12 : vector<1x256x1xi1> to vector<1x256x1xi1>
    %15 = vector.broadcast %14 : vector<1x256x1xi1> to vector<1x256x128xi1>
    %16 = vector.broadcast %13 : f32 to vector<1x256x128xf32>
    %17 = arith.select %15, %3, %16 : vector<1x256x128xi1>, vector<1x256x128xf32>
    %c0_7 = arith.constant 0 : index
    %c0_8 = arith.constant 0 : index
    %c0_9 = arith.constant 0 : index
    %18 = vector.load %arg3[%c0_7, %c0_8, %c0_9] : memref<1x256x128xf32, #tpu.memory_space<vmem>>, vector<1x256x128xf32>
    tpu.vector_store %arg3[%c0_7, %c0_8, %c0_9], %17 {strides = array<i32>} : memref<1x256x128xf32, #tpu.memory_space<vmem>>, vector<1x256x128xf32>,
    %c0_10 = arith.constant 0 : index
    %c0_11 = arith.constant 0 : index
    %c0_12 = arith.constant 0 : index
    %19 = vector.load %arg4[%c0_10, %c0_11, %c0_12] : memref<1x1x1xf32, #tpu.memory_space<vmem>>, vector<1x1x1xf32>
    %20 = arith.extui %12 : vector<1x256x1xi1> to vector<1x256x1xi32>
    %21 = arith.sitofp %20 : vector<1x256x1xi32> to vector<1x256x1xf32>
    %cst_13 = arith.constant dense<0.000000e+00> : vector<1xf32>
    %22 = vector.multi_reduction <add>, %21, %cst_13 [1, 2] : vector<1x256x1xf32> to vector<1xf32>
    %23 = vector.shape_cast %22 : vector<1xf32> to vector<1x1x1xf32>
    %24 = arith.addf %19, %23 : vector<1x1x1xf32>
    %c0_14 = arith.constant 0 : index
    %c0_15 = arith.constant 0 : index
    %c0_16 = arith.constant 0 : index
    %25 = vector.load %arg4[%c0_14, %c0_15, %c0_16] : memref<1x1x1xf32, #tpu.memory_space<vmem>>, vector<1x1x1xf32>
    tpu.vector_store %arg4[%c0_14, %c0_15, %c0_16], %24 {strides = array<i32>} : memref<1x1x1xf32, #tpu.memory_space<vmem>>, vector<1x1x1xf32>,
    return
  }
  func.func @transform_0(%arg0: i32, %arg1: i32) -> (i32, i32, i32) {
    %c0_i32 = arith.constant 0 : i32
    %c0_i32_0 = arith.constant 0 : i32
    return %arg0, %arg1, %c0_i32 : i32, i32, i32
  }
  func.func @transform_1(%arg0: i32, %arg1: i32) -> (i32, i32, i32) {
    %c0_i32 = arith.constant 0 : i32
    %c0_i32_0 = arith.constant 0 : i32
    return %arg0, %arg1, %c0_i32 : i32, i32, i32
  }
  func.func @transform_2(%arg0: i32, %arg1: i32) -> (i32, i32, i32) {
    %c0_i32 = arith.constant 0 : i32
    %c0_i32_0 = arith.constant 0 : i32
    %c0_i32_1 = arith.constant 0 : i32
    return %arg0, %c0_i32, %c0_i32_0 : i32, i32, i32
  }
}

</mosaic_0001>

<llo_original>
// kernel: tpu_custom_call.1
$region0: #{tpu_custom_call.1}
  #allocation0 [shape = 'u32[]', space=smem, size = 0x4, offset = 0x4, fixed_abs, tag = 'smem constant byte address 0x4 - core index']
  #allocation1 [shape = 'u32[144,128]{1,0:T(1,128)}', space=vmem, size = 0x12000, scoped, tag = 'internal scratch']
  %s0 = inlined_call_operand.hbm [shape: f32[2,256,128], index: 0, kind: input, shape index: {}]
  %s1 = inlined_call_operand.hbm [shape: f32[2,256,128], index: 1, kind: output, shape index: {0}]
  %s2 = inlined_call_operand.vmem [shape: f32[2,1,1], index: 2, kind: output, shape index: {1}]
  %3 = xla_tuple %s1, %s2
  %s4 = sld [smem:[#allocation0]]
  $region53: #{tpu_custom_call.1} parent=0
    _
  %s6 = ssub.s32 1, %s4
  %s7 = scalar_select 0, %s6, %s4
  $region1: #{tpu_custom_call.1} parent=0
    #allocation2 [shape = 'u8[262144]{0}', space=vmem, size = 0x40000, scoped, tag = 'input window, operand 0']
    #allocation3 [shape = 's32[2]{0}', space=sflag, size = 0x8, scoped, tag = 'scoped memory for tpu_custom_call.1']
    #allocation4 [shape = 's32[2]{0}', space=sflag, size = 0x8, scoped, tag = 'scoped memory for tpu_custom_call.1']
    #allocation5 [shape = 'u8[262144]{0}', space=vmem, size = 0x40000, scoped, tag = 'output window, operand 0']
    %8 = vsyncpa [#allocation3], 0
    %s9 = scalar_lea.sflag [#allocation3], 1
    %10 = vsyncpa %s9, 0
    %11 = vsyncpa [#allocation4], 0
    %s12 = scalar_lea.sflag [#allocation4], 1
    %13 = vsyncpa %s12, 0
    loop: start=0, step=1, limit=4
    $region2: #{tpu_custom_call.1} parent=1 // loop_pre_header
      _
    $region3: #{tpu_custom_call.1} parent=1 // loop_header
      %s15 = sphi 0, %s19
      %p16 = scmp.ge.s32.totalorder %s15, 4
      %s22 = sphi 0, %s34
      %s23 = sphi 0, %s30
      %s24 = sphi 0, %s22
      %s25 = sphi 0, %s23
      %s26 = sphi 0, %s24
      %s27 = sphi 0, %s25
      %s39 = sphi 0, %s41
      %s42 = sphi 0, %s39
      %s43 = sphi 0, %s42
      %s59 = sphi 0, %s43
      %s67 = sphi 0, %s69
      %s70 = sphi 0, %s67
      %s71 = sphi 0, %s70
      %s87 = sphi 0, %s71
      %s93 = sphi 0, %s95
      %s96 = sphi 0, %s93
      %s97 = sphi 0, %s96
      %s113 = sphi 0, %s97
    $region4: #{tpu_custom_call.1} parent=1 // loop_header_branch
      %18 = sbr.rel (%p16) target = $region8
    $region5: #{tpu_custom_call.1} parent=1 // loop_body
      %s20 = ssub.s32 %s15, 1
      %s21 = ssub.s32 %s15, 2
      %s28 = sadd.s32 1, %s23
      %p29 = scmp.ge.s32.totalorder %s28, 1
      %s30 = scalar_select %p29, 0, %s28
      %s31 = sadd.s32 1, %s22
      %s32 = scalar_select %p29, %s31, %s22
      %p33 = scmp.ge.s32.totalorder %s32, 2
      %s34 = scalar_select %p33, 0, %s32
      %s35 = ssub.s32 %s22, %s34
      %s36 = ssub.s32 %s23, %s30
      %s37 = sor.u32 %s35, %s36
      %p38 = scmp.eq.s32.totalorder %s37, 0
      %s40 = sadd.s32 %s39, 1
      %s41 = scalar_select %p38, %s39, %s40
      %p44 = pneg %p38
      %p45 = scmp.eq.s32.totalorder %s15, 1
      %p46 = por %p44, %p45
      %p47 = scmp.ne.s32.totalorder %s39, %s42
      %p48 = scmp.eq.s32.totalorder %s15, 0
      %p49 = por %p47, %p48
      %p50 = scmp.ne.s32.totalorder %s39, %s42
      %p51 = scmp.eq.s32.totalorder %s20, 1
      %p52 = por %p50, %p51
      %p53 = scmp.ne.s32.totalorder %s42, %s43
      %p54 = scmp.eq.s32.totalorder %s20, 0
      %p55 = por %p53, %p54
      %p56 = scmp.ne.s32.totalorder %s42, %s43
      %p57 = scmp.eq.s32.totalorder %s21, 1
      %p58 = por %p56, %p57
      %p60 = scmp.ne.s32.totalorder %s43, %s59
      %p61 = scmp.eq.s32.totalorder %s21, 0
      %p62 = por %p60, %p61
      %s63 = ssub.s32 %s22, %s34
      %s64 = ssub.s32 %s23, %s30
      %s65 = sor.u32 %s63, %s64
      %p66 = scmp.eq.s32.totalorder %s65, 0
      %s68 = sadd.s32 %s67, 1
      %s69 = scalar_select %p66, %s67, %s68
      %p72 = pneg %p66
      %p73 = scmp.eq.s32.totalorder %s15, 1
      %p74 = por %p72, %p73
      %p75 = scmp.ne.s32.totalorder %s67, %s70
      %p76 = scmp.eq.s32.totalorder %s15, 0
      %p77 = por %p75, %p76
      %p78 = scmp.ne.s32.totalorder %s67, %s70
      %p79 = scmp.eq.s32.totalorder %s20, 1
      %p80 = por %p78, %p79
      %p81 = scmp.ne.s32.totalorder %s70, %s71
      %p82 = scmp.eq.s32.totalorder %s20, 0
      %p83 = por %p81, %p82
      %p84 = scmp.ne.s32.totalorder %s70, %s71
      %p85 = scmp.eq.s32.totalorder %s21, 1
      %p86 = por %p84, %p85
      %p88 = scmp.ne.s32.totalorder %s71, %s87
      %p89 = scmp.eq.s32.totalorder %s21, 0
      %p90 = por %p88, %p89
      %s91 = ssub.s32 %s22, %s34
      %p92 = scmp.eq.s32.totalorder %s91, 0
      %s94 = sadd.s32 %s93, 1
      %s95 = scalar_select %p92, %s93, %s94
      %p98 = pneg %p92
      %p99 = scmp.eq.s32.totalorder %s15, 1
      %p100 = por %p98, %p99
      %p101 = scmp.ne.s32.totalorder %s93, %s96
      %p102 = scmp.eq.s32.totalorder %s15, 0
      %p103 = por %p101, %p102
      %p104 = scmp.ne.s32.totalorder %s93, %s96
      %p105 = scmp.eq.s32.totalorder %s20, 1
      %p106 = por %p104, %p105
      %p107 = scmp.ne.s32.totalorder %s96, %s97
      %p108 = scmp.eq.s32.totalorder %s20, 0
      %p109 = por %p107, %p108
      %p110 = scmp.ne.s32.totalorder %s96, %s97
      %p111 = scmp.eq.s32.totalorder %s21, 1
      %p112 = por %p110, %p111
      %p114 = scmp.ne.s32.totalorder %s97, %s113
      %p115 = scmp.eq.s32.totalorder %s21, 0
      %p116 = por %p114, %p115
      %p117 = scmp.le.s32.totalorder 1, %s15
      %p118 = scmp.lt.s32.totalorder %s15, 3
      %p119 = pnand %p117, %p118
      %p120 = pneg %p119
      // Predicated region
      $region9: #{tpu_custom_call.1} parent=5 // pred_check
        _
      $region10: #{tpu_custom_call.1} parent=5 // pred_check_branch
        %122 = sbr.rel (%p119) target = $region12
      $region11: #{tpu_custom_call.1} parent=5 // pred_region
        %s123 = ssub.s32 %s15, 1
      $region12: #{tpu_custom_call.1} parent=5 // pred_fallthru
        _
      %p124 = scmp.lt.s32.totalorder %s15, 2
      // Predicated region
      $region13: #{tpu_custom_call.1} parent=5 // pred_check
        %p125 = pneg %p124
      $region14: #{tpu_custom_call.1} parent=5 // pred_check_branch
        %127 = sbr.rel (%p125) target = $region16
      $region15: #{tpu_custom_call.1} parent=5 // pred_region
        // Predicated region
        $region17: #{tpu_custom_call.1} parent=15 // pred_check
          %p128 = pneg %p49
        $region18: #{tpu_custom_call.1} parent=15 // pred_check_branch
          %130 = sbr.rel (%p128) target = $region20
        $region19: #{tpu_custom_call.1} parent=15 // pred_region
          %s131 = sand.u32 %s39, 1
          %s132 = scalar_lea.sflag [#allocation3], %s131
          %s133 = sand.u32 %s39, 1
          %s134 = smul.addr %s133, 256
          %s135 = scalar_lea.vmem [#allocation2], %s134
          %s136 = smul.u32 32, %s23
          %s138 = ssub.s32 4096, 4096
          %139 = vsyncadd %s132, %s138
          %s140 = smul.addr %s22, 32
          %s141 = sadd.s32 %s136, %s140
          %s142 = smul.addr %s141, 128
          %s143 = scalar_lea.hbm %s0, %s142
          %s144 = sshll.u32 %s135, 4
          %s145 = int_to_ptr.vmem [resolvable:$true] %s144
          %150 = dma.hbm_to_vmem [thread:$0]  %s143, 4096, %s145, %s132, 128, 128, 8
        $region20: #{tpu_custom_call.1} parent=15 // pred_fallthru
          _
      $region16: #{tpu_custom_call.1} parent=5 // pred_fallthru
        _
      %p151 = scmp.le.s32.totalorder 1, %s15
      %p152 = scmp.lt.s32.totalorder %s15, 3
      %p153 = pnand %p151, %p152
      %p154 = pneg %p153
      // Predicated region
      $region21: #{tpu_custom_call.1} parent=5 // pred_check
        _
      $region22: #{tpu_custom_call.1} parent=5 // pred_check_branch
        %156 = sbr.rel (%p153) target = $region24
      $region23: #{tpu_custom_call.1} parent=5 // pred_region
        %s157 = ssub.s32 %s15, 1
        %s158 = sand.u32 %s42, 1
        %s159 = scalar_lea.sflag [#allocation3], %s158
        %s160 = sand.u32 %s42, 1
        %s161 = smul.addr %s160, 256
        %s162 = scalar_lea.vmem [#allocation2], %s161
        // Predicated region
        $region25: #{tpu_custom_call.1} parent=23 // pred_check
          %p163 = pneg %p55
        $region26: #{tpu_custom_call.1} parent=23 // pred_check_branch
          %165 = sbr.rel (%p163) target = $region28
        $region27: #{tpu_custom_call.1} parent=23 // pred_region
          %166 = dma.done %s159, 4096
        $region28: #{tpu_custom_call.1} parent=23 // pred_fallthru
          _
        %s167 = sand.u32 %s42, 1
        %s168 = scalar_lea.sflag [#allocation3], %s167
        %s169 = sand.u32 %s42, 1
        %s170 = smul.addr %s169, 256
        %s171 = scalar_lea.vmem [#allocation2], %s170
        %p172 = pneg %p55
        %p173 = pneg %p52
        %p174 = pneg %p83
        %p175 = pneg %p80
        %s176 = sand.u32 %s70, 1
        %s177 = scalar_lea.sflag [#allocation4], %s176
        %s178 = sand.u32 %s70, 1
        %s179 = smul.addr %s178, 256
        %s180 = scalar_lea.vmem [#allocation5], %s179
        %p181 = pneg %p109
        %p182 = pneg %p106
        %p183 = scmp.lt.s32.totalorder %s24, 1
        %s184 = scalar_select %p183, %s24, 1
        %s185 = scalar_lea.vmem %s2, %s184
        %s186 = smul.u32 32, %s25
        %s187 = smul.u32 32, %s25
        %p188 = scmp.lt.s32.totalorder %s24, 1
        %s189 = scalar_select %p188, %s24, 1
        %s190 = scalar_lea.vmem %s2, %s189
        %p191 = scmp.eq.s32.totalorder %s25, 0
        // Predicated region
        $region29: #{tpu_custom_call.1} parent=23 // pred_check
          %p192 = pneg %p191
        $region30: #{tpu_custom_call.1} parent=23 // pred_check_branch
          %194 = sbr.rel (%p192) target = $region32
        $region31: #{tpu_custom_call.1} parent=23 // pred_region
          %vm195 = vcmask 0
          %196 = vst.msk [vmem:[%s190] sm:$0x1] %vm195, 0.0
        $region32: #{tpu_custom_call.1} parent=23 // pred_fallthru
          _
        %v197 = vld [vmem:[%s162] sm:$0xff]
        %v198 = vld [vmem:[%s162 + $0x8] sm:$0xff]
        %v199 = vld [vmem:[%s162 + $0x10] sm:$0xff]
        %v200 = vld [vmem:[%s162 + $0x18] sm:$0xff]
        %v201 = vld [vmem:[%s162 + $0x20] sm:$0xff]
        %v202 = vld [vmem:[%s162 + $0x28] sm:$0xff]
        %v203 = vld [vmem:[%s162 + $0x30] sm:$0xff]
        %v204 = vld [vmem:[%s162 + $0x38] sm:$0xff]
        %v205 = vld [vmem:[%s162 + $0x40] sm:$0xff]
        %v206 = vld [vmem:[%s162 + $0x48] sm:$0xff]
        %v207 = vld [vmem:[%s162 + $0x50] sm:$0xff]
        %v208 = vld [vmem:[%s162 + $0x58] sm:$0xff]
        %v209 = vld [vmem:[%s162 + $0x60] sm:$0xff]
        %v210 = vld [vmem:[%s162 + $0x68] sm:$0xff]
        %v211 = vld [vmem:[%s162 + $0x70] sm:$0xff]
        %v212 = vld [vmem:[%s162 + $0x78] sm:$0xff]
        %v213 = vld [vmem:[%s162 + $0x80] sm:$0xff]
        %v214 = vld [vmem:[%s162 + $0x88] sm:$0xff]
        %v215 = vld [vmem:[%s162 + $0x90] sm:$0xff]
        %v216 = vld [vmem:[%s162 + $0x98] sm:$0xff]
        %v217 = vld [vmem:[%s162 + $0xa0] sm:$0xff]
        %v218 = vld [vmem:[%s162 + $0xa8] sm:$0xff]
        %v219 = vld [vmem:[%s162 + $0xb0] sm:$0xff]
        %v220 = vld [vmem:[%s162 + $0xb8] sm:$0xff]
        %v221 = vld [vmem:[%s162 + $0xc0] sm:$0xff]
        %v222 = vld [vmem:[%s162 + $0xc8] sm:$0xff]
        %v223 = vld [vmem:[%s162 + $0xd0] sm:$0xff]
        %v224 = vld [vmem:[%s162 + $0xd8] sm:$0xff]
        %v225 = vld [vmem:[%s162 + $0xe0] sm:$0xff]
        %v226 = vld [vmem:[%s162 + $0xe8] sm:$0xff]
        %v227 = vld [vmem:[%s162 + $0xf0] sm:$0xff]
        %v228 = vld [vmem:[%s162 + $0xf8] sm:$0xff]
        %229 = vmax.xlane.f32.xlu0 %v197
        %v230 = vpop.xlane.xlu0 %229
        %231 = vmax.xlane.f32.xlu0 %v198
        %v232 = vpop.xlane.xlu0 %231
        %233 = vmax.xlane.f32.xlu0 %v199
        %v234 = vpop.xlane.xlu0 %233
        %235 = vmax.xlane.f32.xlu0 %v200
        %v236 = vpop.xlane.xlu0 %235
        %237 = vmax.xlane.f32.xlu0 %v201
        %v238 = vpop.xlane.xlu0 %237
        %239 = vmax.xlane.f32.xlu0 %v202
        %v240 = vpop.xlane.xlu0 %239
        %241 = vmax.xlane.f32.xlu0 %v203
        %v242 = vpop.xlane.xlu0 %241
        %243 = vmax.xlane.f32.xlu0 %v204
        %v244 = vpop.xlane.xlu0 %243
        %245 = vmax.xlane.f32.xlu0 %v205
        %v246 = vpop.xlane.xlu0 %245
        %247 = vmax.xlane.f32.xlu0 %v206
        %v248 = vpop.xlane.xlu0 %247
        %249 = vmax.xlane.f32.xlu0 %v207
        %v250 = vpop.xlane.xlu0 %249
        %251 = vmax.xlane.f32.xlu0 %v208
        %v252 = vpop.xlane.xlu0 %251
        %253 = vmax.xlane.f32.xlu0 %v209
        %v254 = vpop.xlane.xlu0 %253
        %255 = vmax.xlane.f32.xlu0 %v210
        %v256 = vpop.xlane.xlu0 %255
        %257 = vmax.xlane.f32.xlu0 %v211
        %v258 = vpop.xlane.xlu0 %257
        %259 = vmax.xlane.f32.xlu0 %v212
        %v260 = vpop.xlane.xlu0 %259
        %261 = vmax.xlane.f32.xlu0 %v213
        %v262 = vpop.xlane.xlu0 %261
        %263 = vmax.xlane.f32.xlu0 %v214
        %v264 = vpop.xlane.xlu0 %263
        %265 = vmax.xlane.f32.xlu0 %v215
        %v266 = vpop.xlane.xlu0 %265
        %267 = vmax.xlane.f32.xlu0 %v216
        %v268 = vpop.xlane.xlu0 %267
        %269 = vmax.xlane.f32.xlu0 %v217
        %v270 = vpop.xlane.xlu0 %269
        %271 = vmax.xlane.f32.xlu0 %v218
        %v272 = vpop.xlane.xlu0 %271
        %273 = vmax.xlane.f32.xlu0 %v219
        %v274 = vpop.xlane.xlu0 %273
        %275 = vmax.xlane.f32.xlu0 %v220
        %v276 = vpop.xlane.xlu0 %275
        %277 = vmax.xlane.f32.xlu0 %v221
        %v278 = vpop.xlane.xlu0 %277
        %279 = vmax.xlane.f32.xlu0 %v222
        %v280 = vpop.xlane.xlu0 %279
        %281 = vmax.xlane.f32.xlu0 %v223
        %v282 = vpop.xlane.xlu0 %281
        %283 = vmax.xlane.f32.xlu0 %v224
        %v284 = vpop.xlane.xlu0 %283
        %285 = vmax.xlane.f32.xlu0 %v225
        %v286 = vpop.xlane.xlu0 %285
        %287 = vmax.xlane.f32.xlu0 %v226
        %v288 = vpop.xlane.xlu0 %287
        %289 = vmax.xlane.f32.xlu0 %v227
        %v290 = vpop.xlane.xlu0 %289
        %291 = vmax.xlane.f32.xlu0 %v228
        %v292 = vpop.xlane.xlu0 %291
        %293 = vadd.xlane.f32.xlu0 %v197
        %v294 = vpop.xlane.xlu0 %293
        %295 = vadd.xlane.f32.xlu0 %v198
        %v296 = vpop.xlane.xlu0 %295
        %297 = vadd.xlane.f32.xlu0 %v199
        %v298 = vpop.xlane.xlu0 %297
        %299 = vadd.xlane.f32.xlu0 %v200
        %v300 = vpop.xlane.xlu0 %299
        %301 = vadd.xlane.f32.xlu0 %v201
        %v302 = vpop.xlane.xlu0 %301
        %303 = vadd.xlane.f32.xlu0 %v202
        %v304 = vpop.xlane.xlu0 %303
        %305 = vadd.xlane.f32.xlu0 %v203
        %v306 = vpop.xlane.xlu0 %305
        %307 = vadd.xlane.f32.xlu0 %v204
        %v308 = vpop.xlane.xlu0 %307
        %309 = vadd.xlane.f32.xlu0 %v205
        %v310 = vpop.xlane.xlu0 %309
        %311 = vadd.xlane.f32.xlu0 %v206
        %v312 = vpop.xlane.xlu0 %311
        %313 = vadd.xlane.f32.xlu0 %v207
        %v314 = vpop.xlane.xlu0 %313
        %315 = vadd.xlane.f32.xlu0 %v208
        %v316 = vpop.xlane.xlu0 %315
        %317 = vadd.xlane.f32.xlu0 %v209
        %v318 = vpop.xlane.xlu0 %317
        %319 = vadd.xlane.f32.xlu0 %v210
        %v320 = vpop.xlane.xlu0 %319
        %321 = vadd.xlane.f32.xlu0 %v211
        %v322 = vpop.xlane.xlu0 %321
        %323 = vadd.xlane.f32.xlu0 %v212
        %v324 = vpop.xlane.xlu0 %323
        %325 = vadd.xlane.f32.xlu0 %v213
        %v326 = vpop.xlane.xlu0 %325
        %327 = vadd.xlane.f32.xlu0 %v214
        %v328 = vpop.xlane.xlu0 %327
        %329 = vadd.xlane.f32.xlu0 %v215
        %v330 = vpop.xlane.xlu0 %329
        %331 = vadd.xlane.f32.xlu0 %v216
        %v332 = vpop.xlane.xlu0 %331
        %333 = vadd.xlane.f32.xlu0 %v217
        %v334 = vpop.xlane.xlu0 %333
        %335 = vadd.xlane.f32.xlu0 %v218
        %v336 = vpop.xlane.xlu0 %335
        %337 = vadd.xlane.f32.xlu0 %v219
        %v338 = vpop.xlane.xlu0 %337
        %339 = vadd.xlane.f32.xlu0 %v220
        %v340 = vpop.xlane.xlu0 %339
        %341 = vadd.xlane.f32.xlu0 %v221
        %v342 = vpop.xlane.xlu0 %341
        %343 = vadd.xlane.f32.xlu0 %v222
        %v344 = vpop.xlane.xlu0 %343
        %345 = vadd.xlane.f32.xlu0 %v223
        %v346 = vpop.xlane.xlu0 %345
        %347 = vadd.xlane.f32.xlu0 %v224
        %v348 = vpop.xlane.xlu0 %347
        %349 = vadd.xlane.f32.xlu0 %v225
        %v350 = vpop.xlane.xlu0 %349
        %351 = vadd.xlane.f32.xlu0 %v226
        %v352 = vpop.xlane.xlu0 %351
        %353 = vadd.xlane.f32.xlu0 %v227
        %v354 = vpop.xlane.xlu0 %353
        %355 = vadd.xlane.f32.xlu0 %v228
        %v356 = vpop.xlane.xlu0 %355
        %v357 = vmul.f32 %v294, 0.0078125
        %v358 = vmul.f32 %v296, 0.0078125
        %v359 = vmul.f32 %v298, 0.0078125
        %v360 = vmul.f32 %v300, 0.0078125
        %v361 = vmul.f32 %v302, 0.0078125
        %v362 = vmul.f32 %v304, 0.0078125
        %v363 = vmul.f32 %v306, 0.0078125
        %v364 = vmul.f32 %v308, 0.0078125
        %v365 = vmul.f32 %v310, 0.0078125
        %v366 = vmul.f32 %v312, 0.0078125
        %v367 = vmul.f32 %v314, 0.0078125
        %v368 = vmul.f32 %v316, 0.0078125
        %v369 = vmul.f32 %v318, 0.0078125
        %v370 = vmul.f32 %v320, 0.0078125
        %v371 = vmul.f32 %v322, 0.0078125
        %v372 = vmul.f32 %v324, 0.0078125
        %v373 = vmul.f32 %v326, 0.0078125
        %v374 = vmul.f32 %v328, 0.0078125
        %v375 = vmul.f32 %v330, 0.0078125
        %v376 = vmul.f32 %v332, 0.0078125
        %v377 = vmul.f32 %v334, 0.0078125
        %v378 = vmul.f32 %v336, 0.0078125
        %v379 = vmul.f32 %v338, 0.0078125
        %v380 = vmul.f32 %v340, 0.0078125
        %v381 = vmul.f32 %v342, 0.0078125
        %v382 = vmul.f32 %v344, 0.0078125
        %v383 = vmul.f32 %v346, 0.0078125
        %v384 = vmul.f32 %v348, 0.0078125
        %v385 = vmul.f32 %v350, 0.0078125
        %v386 = vmul.f32 %v352, 0.0078125
        %v387 = vmul.f32 %v354, 0.0078125
        %v388 = vmul.f32 %v356, 0.0078125
        %v389 = vadd.f32 %v230, %v357
        %v390 = vadd.f32 %v232, %v358
        %v391 = vadd.f32 %v234, %v359
        %v392 = vadd.f32 %v236, %v360
        %v393 = vadd.f32 %v238, %v361
        %v394 = vadd.f32 %v240, %v362
        %v395 = vadd.f32 %v242, %v363
        %v396 = vadd.f32 %v244, %v364
        %v397 = vadd.f32 %v246, %v365
        %v398 = vadd.f32 %v248, %v366
        %v399 = vadd.f32 %v250, %v367
        %v400 = vadd.f32 %v252, %v368
        %v401 = vadd.f32 %v254, %v369
        %v402 = vadd.f32 %v256, %v370
        %v403 = vadd.f32 %v258, %v371
        %v404 = vadd.f32 %v260, %v372
        %v405 = vadd.f32 %v262, %v373
        %v406 = vadd.f32 %v264, %v374
        %v407 = vadd.f32 %v266, %v375
        %v408 = vadd.f32 %v268, %v376
        %v409 = vadd.f32 %v270, %v377
        %v410 = vadd.f32 %v272, %v378
        %v411 = vadd.f32 %v274, %v379
        %v412 = vadd.f32 %v276, %v380
        %v413 = vadd.f32 %v278, %v381
        %v414 = vadd.f32 %v280, %v382
        %v415 = vadd.f32 %v282, %v383
        %v416 = vadd.f32 %v284, %v384
        %v417 = vadd.f32 %v286, %v385
        %v418 = vadd.f32 %v288, %v386
        %v419 = vadd.f32 %v290, %v387
        %v420 = vadd.f32 %v292, %v388
        %vm421 = vcmp.gt.f32.partialorder %v389, 0.0
        %vm422 = vcmp.gt.f32.partialorder %v390, 0.0
        %vm423 = vcmp.gt.f32.partialorder %v391, 0.0
        %vm424 = vcmp.gt.f32.partialorder %v392, 0.0
        %vm425 = vcmp.gt.f32.partialorder %v393, 0.0
        %vm426 = vcmp.gt.f32.partialorder %v394, 0.0
        %vm427 = vcmp.gt.f32.partialorder %v395, 0.0
        %vm428 = vcmp.gt.f32.partialorder %v396, 0.0
        %vm429 = vcmp.gt.f32.partialorder %v397, 0.0
        %vm430 = vcmp.gt.f32.partialorder %v398, 0.0
        %vm431 = vcmp.gt.f32.partialorder %v399, 0.0
        %vm432 = vcmp.gt.f32.partialorder %v400, 0.0
        %vm433 = vcmp.gt.f32.partialorder %v401, 0.0
        %vm434 = vcmp.gt.f32.partialorder %v402, 0.0
        %vm435 = vcmp.gt.f32.partialorder %v403, 0.0
        %vm436 = vcmp.gt.f32.partialorder %v404, 0.0
        %vm437 = vcmp.gt.f32.partialorder %v405, 0.0
        %vm438 = vcmp.gt.f32.partialorder %v406, 0.0
        %vm439 = vcmp.gt.f32.partialorder %v407, 0.0
        %vm440 = vcmp.gt.f32.partialorder %v408, 0.0
        %vm441 = vcmp.gt.f32.partialorder %v409, 0.0
        %vm442 = vcmp.gt.f32.partialorder %v410, 0.0
        %vm443 = vcmp.gt.f32.partialorder %v411, 0.0
        %vm444 = vcmp.gt.f32.partialorder %v412, 0.0
        %vm445 = vcmp.gt.f32.partialorder %v413, 0.0
        %vm446 = vcmp.gt.f32.partialorder %v414, 0.0
        %vm447 = vcmp.gt.f32.partialorder %v415, 0.0
        %vm448 = vcmp.gt.f32.partialorder %v416, 0.0
        %vm449 = vcmp.gt.f32.partialorder %v417, 0.0
        %vm450 = vcmp.gt.f32.partialorder %v418, 0.0
        %vm451 = vcmp.gt.f32.partialorder %v419, 0.0
        %vm452 = vcmp.gt.f32.partialorder %v420, 0.0
        %v453 = vsel %vm421, 1, 0
        %v454 = vsel %vm422, 1, 0
        %v455 = vsel %vm423, 1, 0
        %v456 = vsel %vm424, 1, 0
        %v457 = vsel %vm425, 1, 0
        %v458 = vsel %vm426, 1, 0
        %v459 = vsel %vm427, 1, 0
        %v460 = vsel %vm428, 1, 0
        %v461 = vsel %vm429, 1, 0
        %v462 = vsel %vm430, 1, 0
        %v463 = vsel %vm431, 1, 0
        %v464 = vsel %vm432, 1, 0
        %v465 = vsel %vm433, 1, 0
        %v466 = vsel %vm434, 1, 0
        %v467 = vsel %vm435, 1, 0
        %v468 = vsel %vm436, 1, 0
        %v469 = vsel %vm437, 1, 0
        %v470 = vsel %vm438, 1, 0
        %v471 = vsel %vm439, 1, 0
        %v472 = vsel %vm440, 1, 0
        %v473 = vsel %vm441, 1, 0
        %v474 = vsel %vm442, 1, 0
        %v475 = vsel %vm443, 1, 0
        %v476 = vsel %vm444, 1, 0
        %v477 = vsel %vm445, 1, 0
        %v478 = vsel %vm446, 1, 0
        %v479 = vsel %vm447, 1, 0
        %v480 = vsel %vm448, 1, 0
        %v481 = vsel %vm449, 1, 0
        %v482 = vsel %vm450, 1, 0
        %v483 = vsel %vm451, 1, 0
        %v484 = vsel %vm452, 1, 0
        %vm485 = vcmp.eq.s32.totalorder %v453, 1
        %vm486 = vcmp.eq.s32.totalorder %v454, 1
        %vm487 = vcmp.eq.s32.totalorder %v455, 1
        %vm488 = vcmp.eq.s32.totalorder %v456, 1
        %vm489 = vcmp.eq.s32.totalorder %v457, 1
        %vm490 = vcmp.eq.s32.totalorder %v458, 1
        %vm491 = vcmp.eq.s32.totalorder %v459, 1
        %vm492 = vcmp.eq.s32.totalorder %v460, 1
        %vm493 = vcmp.eq.s32.totalorder %v461, 1
        %vm494 = vcmp.eq.s32.totalorder %v462, 1
        %vm495 = vcmp.eq.s32.totalorder %v463, 1
        %vm496 = vcmp.eq.s32.totalorder %v464, 1
        %vm497 = vcmp.eq.s32.totalorder %v465, 1
        %vm498 = vcmp.eq.s32.totalorder %v466, 1
        %vm499 = vcmp.eq.s32.totalorder %v467, 1
        %vm500 = vcmp.eq.s32.totalorder %v468, 1
        %vm501 = vcmp.eq.s32.totalorder %v469, 1
        %vm502 = vcmp.eq.s32.totalorder %v470, 1
        %vm503 = vcmp.eq.s32.totalorder %v471, 1
        %vm504 = vcmp.eq.s32.totalorder %v472, 1
        %vm505 = vcmp.eq.s32.totalorder %v473, 1
        %vm506 = vcmp.eq.s32.totalorder %v474, 1
        %vm507 = vcmp.eq.s32.totalorder %v475, 1
        %vm508 = vcmp.eq.s32.totalorder %v476, 1
        %vm509 = vcmp.eq.s32.totalorder %v477, 1
        %vm510 = vcmp.eq.s32.totalorder %v478, 1
        %vm511 = vcmp.eq.s32.totalorder %v479, 1
        %vm512 = vcmp.eq.s32.totalorder %v480, 1
        %vm513 = vcmp.eq.s32.totalorder %v481, 1
        %vm514 = vcmp.eq.s32.totalorder %v482, 1
        %vm515 = vcmp.eq.s32.totalorder %v483, 1
        %vm516 = vcmp.eq.s32.totalorder %v484, 1
        %v517 = vsel %vm485, %v197, 0.0
        %v518 = vsel %vm486, %v198, 0.0
        %v519 = vsel %vm487, %v199, 0.0
        %v520 = vsel %vm488, %v200, 0.0
        %v521 = vsel %vm489, %v201, 0.0
        %v522 = vsel %vm490, %v202, 0.0
        %v523 = vsel %vm491, %v203, 0.0
        %v524 = vsel %vm492, %v204, 0.0
        %v525 = vsel %vm493, %v205, 0.0
        %v526 = vsel %vm494, %v206, 0.0
        %v527 = vsel %vm495, %v207, 0.0
        %v528 = vsel %vm496, %v208, 0.0
        %v529 = vsel %vm497, %v209, 0.0
        %v530 = vsel %vm498, %v210, 0.0
        %v531 = vsel %vm499, %v211, 0.0
        %v532 = vsel %vm500, %v212, 0.0
        %v533 = vsel %vm501, %v213, 0.0
        %v534 = vsel %vm502, %v214, 0.0
        %v535 = vsel %vm503, %v215, 0.0
        %v536 = vsel %vm504, %v216, 0.0
        %v537 = vsel %vm505, %v217, 0.0
        %v538 = vsel %vm506, %v218, 0.0
        %v539 = vsel %vm507, %v219, 0.0
        %v540 = vsel %vm508, %v220, 0.0
        %v541 = vsel %vm509, %v221, 0.0
        %v542 = vsel %vm510, %v222, 0.0
        %v543 = vsel %vm511, %v223, 0.0
        %v544 = vsel %vm512, %v224, 0.0
        %v545 = vsel %vm513, %v225, 0.0
        %v546 = vsel %vm514, %v226, 0.0
        %v547 = vsel %vm515, %v227, 0.0
        %v548 = vsel %vm516, %v228, 0.0
        %549 = vst [vmem:[%s180] sm:$0xff] %v517
        %550 = vst [vmem:[%s180 + $0x8] sm:$0xff] %v518
        %551 = vst [vmem:[%s180 + $0x10] sm:$0xff] %v519
        %552 = vst [vmem:[%s180 + $0x18] sm:$0xff] %v520
        %553 = vst [vmem:[%s180 + $0x20] sm:$0xff] %v521
        %554 = vst [vmem:[%s180 + $0x28] sm:$0xff] %v522
        %555 = vst [vmem:[%s180 + $0x30] sm:$0xff] %v523
        %556 = vst [vmem:[%s180 + $0x38] sm:$0xff] %v524
        %557 = vst [vmem:[%s180 + $0x40] sm:$0xff] %v525
        %558 = vst [vmem:[%s180 + $0x48] sm:$0xff] %v526
        %559 = vst [vmem:[%s180 + $0x50] sm:$0xff] %v527
        %560 = vst [vmem:[%s180 + $0x58] sm:$0xff] %v528
        %561 = vst [vmem:[%s180 + $0x60] sm:$0xff] %v529
        %562 = vst [vmem:[%s180 + $0x68] sm:$0xff] %v530
        %563 = vst [vmem:[%s180 + $0x70] sm:$0xff] %v531
        %564 = vst [vmem:[%s180 + $0x78] sm:$0xff] %v532
        %565 = vst [vmem:[%s180 + $0x80] sm:$0xff] %v533
        %566 = vst [vmem:[%s180 + $0x88] sm:$0xff] %v534
        %567 = vst [vmem:[%s180 + $0x90] sm:$0xff] %v535
        %568 = vst [vmem:[%s180 + $0x98] sm:$0xff] %v536
        %569 = vst [vmem:[%s180 + $0xa0] sm:$0xff] %v537
        %570 = vst [vmem:[%s180 + $0xa8] sm:$0xff] %v538
        %571 = vst [vmem:[%s180 + $0xb0] sm:$0xff] %v539
        %572 = vst [vmem:[%s180 + $0xb8] sm:$0xff] %v540
        %573 = vst [vmem:[%s180 + $0xc0] sm:$0xff] %v541
        %574 = vst [vmem:[%s180 + $0xc8] sm:$0xff] %v542
        %575 = vst [vmem:[%s180 + $0xd0] sm:$0xff] %v543
        %576 = vst [vmem:[%s180 + $0xd8] sm:$0xff] %v544
        %577 = vst [vmem:[%s180 + $0xe0] sm:$0xff] %v545
        %578 = vst [vmem:[%s180 + $0xe8] sm:$0xff] %v546
        %579 = vst [vmem:[%s180 + $0xf0] sm:$0xff] %v547
        %580 = vst [vmem:[%s180 + $0xf8] sm:$0xff] %v548
        %v581 = vld [vmem:[%s190] sm:$0x1]
        %v582 = vcvt.s32.f32 %v453
        %v583 = vcvt.s32.f32 %v454
        %v584 = vcvt.s32.f32 %v455
        %v585 = vcvt.s32.f32 %v456
        %v586 = vcvt.s32.f32 %v457
        %v587 = vcvt.s32.f32 %v458
        %v588 = vcvt.s32.f32 %v459
        %v589 = vcvt.s32.f32 %v460
        %v590 = vcvt.s32.f32 %v461
        %v591 = vcvt.s32.f32 %v462
        %v592 = vcvt.s32.f32 %v463
        %v593 = vcvt.s32.f32 %v464
        %v594 = vcvt.s32.f32 %v465
        %v595 = vcvt.s32.f32 %v466
        %v596 = vcvt.s32.f32 %v467
        %v597 = vcvt.s32.f32 %v468
        %v598 = vcvt.s32.f32 %v469
        %v599 = vcvt.s32.f32 %v470
        %v600 = vcvt.s32.f32 %v471
        %v601 = vcvt.s32.f32 %v472
        %v602 = vcvt.s32.f32 %v473
        %v603 = vcvt.s32.f32 %v474
        %v604 = vcvt.s32.f32 %v475
        %v605 = vcvt.s32.f32 %v476
        %v606 = vcvt.s32.f32 %v477
        %v607 = vcvt.s32.f32 %v478
        %v608 = vcvt.s32.f32 %v479
        %v609 = vcvt.s32.f32 %v480
        %v610 = vcvt.s32.f32 %v481
        %v611 = vcvt.s32.f32 %v482
        %v612 = vcvt.s32.f32 %v483
        %v613 = vcvt.s32.f32 %v484
        %vm614 = vcmask 7168
        %v615 = vsel %vm614, %v582, 0.0
        %v616 = vsel %vm614, %v583, 0.0
        %v617 = vadd.f32 %v615, %v616
        %v618 = vsel %vm614, %v584, 0.0
        %v619 = vadd.f32 %v617, %v618
        %v620 = vsel %vm614, %v585, 0.0
        %v621 = vadd.f32 %v619, %v620
        %v622 = vsel %vm614, %v586, 0.0
        %v623 = vadd.f32 %v621, %v622
        %v624 = vsel %vm614, %v587, 0.0
        %v625 = vadd.f32 %v623, %v624
        %v626 = vsel %vm614, %v588, 0.0
        %v627 = vadd.f32 %v625, %v626
        %v628 = vsel %vm614, %v589, 0.0
        %v629 = vadd.f32 %v627, %v628
        %v630 = vsel %vm614, %v590, 0.0
        %v631 = vadd.f32 %v629, %v630
        %v632 = vsel %vm614, %v591, 0.0
        %v633 = vadd.f32 %v631, %v632
        %v634 = vsel %vm614, %v592, 0.0
        %v635 = vadd.f32 %v633, %v634
        %v636 = vsel %vm614, %v593, 0.0
        %v637 = vadd.f32 %v635, %v636
        %v638 = vsel %vm614, %v594, 0.0
        %v639 = vadd.f32 %v637, %v638
        %v640 = vsel %vm614, %v595, 0.0
        %v641 = vadd.f32 %v639, %v640
        %v642 = vsel %vm614, %v596, 0.0
        %v643 = vadd.f32 %v641, %v642
        %v644 = vsel %vm614, %v597, 0.0
        %v645 = vadd.f32 %v643, %v644
        %v646 = vsel %vm614, %v598, 0.0
        %v647 = vadd.f32 %v645, %v646
        %v648 = vsel %vm614, %v599, 0.0
        %v649 = vadd.f32 %v647, %v648
        %v650 = vsel %vm614, %v600, 0.0
        %v651 = vadd.f32 %v649, %v650
        %v652 = vsel %vm614, %v601, 0.0
        %v653 = vadd.f32 %v651, %v652
        %v654 = vsel %vm614, %v602, 0.0
        %v655 = vadd.f32 %v653, %v654
        %v656 = vsel %vm614, %v603, 0.0
        %v657 = vadd.f32 %v655, %v656
        %v658 = vsel %vm614, %v604, 0.0
        %v659 = vadd.f32 %v657, %v658
        %v660 = vsel %vm614, %v605, 0.0
        %v661 = vadd.f32 %v659, %v660
        %v662 = vsel %vm614, %v606, 0.0
        %v663 = vadd.f32 %v661, %v662
        %v664 = vsel %vm614, %v607, 0.0
        %v665 = vadd.f32 %v663, %v664
        %v666 = vsel %vm614, %v608, 0.0
        %v667 = vadd.f32 %v665, %v666
        %v668 = vsel %vm614, %v609, 0.0
        %v669 = vadd.f32 %v667, %v668
        %v670 = vsel %vm614, %v610, 0.0
        %v671 = vadd.f32 %v669, %v670
        %v672 = vsel %vm614, %v611, 0.0
        %v673 = vadd.f32 %v671, %v672
        %v674 = vsel %vm614, %v612, 0.0
        %v675 = vadd.f32 %v673, %v674
        %v676 = vsel %vm614, %v613, 0.0
        %v677 = vadd.f32 %v675, %v676
        %678 = vadd.xlane.f32.xlu0 %v677
        %v679 = vpop.xlane.xlu0 %678
        %v680 = vrot.slane %v679, 4
        %v681 = vadd.f32 %v679, %v680
        %v682 = vrot.slane %v681, 2
        %v683 = vadd.f32 %v681, %v682
        %v684 = vrot.slane %v683, 1
        %v685 = vadd.f32 %v683, %v684
        %v686 = vadd.f32 %v581, %v685
        %vm687 = vcmask 0
        %688 = vst.msk [vmem:[%s190] sm:$0x1] %vm687, %v686
        %s689 = sand.u32 %s70, 1
        %s690 = scalar_lea.sflag [#allocation4], %s689
        %s691 = sand.u32 %s70, 1
        %s692 = smul.addr %s691, 256
        %s693 = scalar_lea.vmem [#allocation5], %s692
        %p694 = scmp.lt.s32.totalorder %s24, 1
        %s695 = scalar_select %p694, %s24, 1
        %s696 = scalar_lea.vmem %s2, %s695
        // Predicated region
        $region33: #{tpu_custom_call.1} parent=23 // pred_check
          %p697 = pneg %p80
        $region34: #{tpu_custom_call.1} parent=23 // pred_check_branch
          %699 = sbr.rel (%p697) target = $region36
        $region35: #{tpu_custom_call.1} parent=23 // pred_region
          %s700 = smul.u32 32, %s25
          %s702 = ssub.s32 4096, 4096
          %703 = vsyncadd %s690, %s702
          %s704 = smul.addr %s24, 32
          %s705 = sadd.s32 %s700, %s704
          %s706 = smul.addr %s705, 128
          %s707 = scalar_lea.hbm %s1, %s706
          %s708 = sshll.u32 %s693, 4
          %s709 = int_to_ptr.vmem [resolvable:$true] %s708
          %714 = dma.vmem_to_hbm [thread:$0]  %s709, 4096, %s707, %s690, 128, 128, 8
        $region36: #{tpu_custom_call.1} parent=23 // pred_fallthru
          _
        // Predicated region
        $region37: #{tpu_custom_call.1} parent=23 // pred_check
          %p715 = pneg %p106
        $region38: #{tpu_custom_call.1} parent=23 // pred_check_branch
          %717 = sbr.rel (%p715) target = $region40
        $region39: #{tpu_custom_call.1} parent=23 // pred_region
          _
        $region40: #{tpu_custom_call.1} parent=23 // pred_fallthru
          _
      $region24: #{tpu_custom_call.1} parent=5 // pred_fallthru
        _
      %p718 = scmp.le.s32.totalorder 2, %s15
      // Predicated region
      $region41: #{tpu_custom_call.1} parent=5 // pred_check
        %p719 = pneg %p718
      $region42: #{tpu_custom_call.1} parent=5 // pred_check_branch
        %721 = sbr.rel (%p719) target = $region44
      $region43: #{tpu_custom_call.1} parent=5 // pred_region
        %s722 = ssub.s32 %s15, 2
        // Predicated region
        $region45: #{tpu_custom_call.1} parent=43 // pred_check
          %p723 = pneg %p86
        $region46: #{tpu_custom_call.1} parent=43 // pred_check_branch
          %725 = sbr.rel (%p723) target = $region48
        $region47: #{tpu_custom_call.1} parent=43 // pred_region
          %s726 = sand.u32 %s71, 1
          %s727 = scalar_lea.sflag [#allocation4], %s726
          %s728 = sand.u32 %s71, 1
          %s729 = smul.addr %s728, 256
          %s730 = scalar_lea.vmem [#allocation5], %s729
          %731 = dma.done %s727, 4096
        $region48: #{tpu_custom_call.1} parent=43 // pred_fallthru
          _
        // Predicated region
        $region49: #{tpu_custom_call.1} parent=43 // pred_check
          %p732 = pneg %p112
        $region50: #{tpu_custom_call.1} parent=43 // pred_check_branch
          %734 = sbr.rel (%p732) target = $region52
        $region51: #{tpu_custom_call.1} parent=43 // pred_region
          %p735 = scmp.lt.s32.totalorder %s26, 1
          %s736 = scalar_select %p735, %s26, 1
          %s737 = scalar_lea.vmem %s2, %s736
        $region52: #{tpu_custom_call.1} parent=43 // pred_fallthru
          _
      $region44: #{tpu_custom_call.1} parent=5 // pred_fallthru
        _
    $region6: #{tpu_custom_call.1} parent=1 // loop_footer
      %s19 = sadd.s32 1, %s15
    $region7: #{tpu_custom_call.1} parent=1 // loop_footer_branch
      %14 = sbr.rel target = $region3
    $region8: #{tpu_custom_call.1} parent=1 // loop_exit
      _
    %738 = vsyncpa [#allocation3], 1
    %s739 = scalar_lea.sflag [#allocation3], 1
    %740 = vsyncpa %s739, 1
    %741 = vsyncpa [#allocation4], 1
    %s742 = scalar_lea.sflag [#allocation4], 1
    %743 = vsyncpa %s742, 1

</llo_original>
